<compile_context>
chip_gen: v7x
topology: tpu7x:2x2x1
jax: 0.10.0
libtpu: 0.0.40
codegen_flags: <defaults>
</compile_context>

<pallas_src>
import functools

import jax
import jax.numpy as jnp
from jax.experimental import pallas as pl
from jax.experimental.pallas import tpu as pltpu

LANES = 128
SUBLANES = 8
# Sentinel pad values: sigmoid(40) == 1.0 exactly in f32, so with target 1 both
# the clamped BCE and the focal weight are exactly 0 -> padded elements add 0.
_PAD_LOGIT = 40.0
_PAD_TARGET = 1.0


def _num_tensorcores():
    """2 on dual-TensorCore chips (v7x), else 1 (v5e/v6e)."""
    try:
        kind = (getattr(jax.devices()[0], "device_kind", "") or "").lower()
    except Exception:
        kind = ""
    return 2 if "v7" in kind else 1


def _focal_loss_kernel(x_ref, t_ref, o_ref, *, alpha, gamma, rows_total, tile_rows):
    c = pl.program_id(0)            # "parallel" (core) axis
    i = pl.program_id(1)            # "arbitrary" (reduction) axis
    steps = pl.num_programs(1)

    @pl.when(i == 0)
    def _():
        o_ref[...] = jnp.zeros_like(o_ref)

    x = x_ref[...].astype(jnp.float32)
    t = t_ref[...].astype(jnp.float32)

    # torch.sigmoid + F.binary_cross_entropy (each log term clamped at -100).
    p = jax.nn.sigmoid(x)
    log_p = jnp.maximum(jnp.log(p), -100.0)
    log_1mp = jnp.maximum(jnp.log(1.0 - p), -100.0)
    # -(t*log_p + (1-t)*log_1mp), refactored to save a multiply.
    bce = -(log_1mp + t * (log_p - log_1mp))

    # 1 - pt, with pt = t*p + (1-t)*(1-p)  ==  p + t*(1 - 2p)
    one_m_pt = p + t * (1.0 - 2.0 * p)

    g = float(gamma)
    if g == 0.0:
        focal_w = jnp.ones_like(one_m_pt)
    elif g.is_integer() and g > 0:
        # Square-and-multiply: VPU multiplies only, no EUP pow.
        e = int(g)
        base, focal_w = one_m_pt, None
        while e:
            if e & 1:
                focal_w = base if focal_w is None else focal_w * base
            e >>= 1
            if e:
                base = base * base
    else:
        focal_w = jnp.power(one_m_pt, g)     # non-integer gamma fallback

    # alpha*t + (1-alpha)*(1-t)  ==  (1-alpha) + (2*alpha-1)*t
    alpha_w = (1.0 - float(alpha)) + (2.0 * float(alpha) - 1.0) * t

    loss = alpha_w * focal_w * bce           # (tile_rows, LANES)

    def accumulate(v):
        # (tile_rows,128) -> (tile_rows//8, 8, 128): whole-vreg regrouping, so the
        # reduction is pure VPU adds into the single-vreg resident accumulator.
        o_ref[...] += v.reshape(tile_rows // SUBLANES, SUBLANES, LANES).sum(axis=0)

    # Row-tail handling: only the block that overhangs the row count pays for an
    # iota mask; all steady-state blocks accumulate unmasked.
    block_idx = c * steps + i
    valid_rows = rows_total - block_idx * tile_rows

    @pl.when(valid_rows >= tile_rows)
    def _():
        accumulate(loss)

    @pl.when(valid_rows < tile_rows)
    def _():
        row = jax.lax.broadcasted_iota(jnp.int32, (tile_rows, LANES), 0)
        accumulate(jnp.where(row < valid_rows, loss, 0.0))


def focal_loss(predict, target, alpha=0.25, gamma=2.0):
    """Pallas TPU focal loss; predict = logits (any shape), target same shape."""
    x = predict.reshape(-1)
    t = target.reshape(-1)
    n = int(x.shape[0])

    # Lane tail: only when n % 128 != 0 do we touch HBM before the kernel, and the
    # pad uses sentinels (exactly zero loss) so no in-kernel lane mask exists.
    rem = n % LANES
    if rem:
        pad = LANES - rem
        x = jnp.pad(x, (0, pad), constant_values=_PAD_LOGIT)
        t = jnp.pad(t, (0, pad), constant_values=_PAD_TARGET)
    rows = int(x.shape[0]) // LANES
    x2 = x.reshape(rows, LANES)      # free bitcast when rem == 0 (no HBM pass)
    t2 = t.reshape(rows, LANES)

    num_cores = _num_tensorcores()
    max_tile_rows = 2048 if num_cores > 1 else 1024     # bigger tiles on v7x
    tile_rows = min(max_tile_rows, pl.cdiv(rows, SUBLANES) * SUBLANES)
    blocks = pl.cdiv(rows, tile_rows)
    num_partials = min(num_cores, blocks)
    steps = pl.cdiv(blocks, num_partials)

    # Clamp so every DMA stays fully in-bounds; the kernel masks with the *logical*
    # block index, so clamped (duplicate) data for overflow slots sums to zero.
    def in_map(c, i):
        return (jnp.minimum(c * steps + i, blocks - 1), 0)

    in_spec = pl.BlockSpec((tile_rows, LANES), in_map)
    out_spec = pl.BlockSpec((SUBLANES, LANES), lambda c, i: (c, 0))

    kernel = functools.partial(
        _focal_loss_kernel,
        alpha=float(alpha),
        gamma=float(gamma),
        rows_total=int(rows),
        tile_rows=int(tile_rows),
    )

    partials = pl.pallas_call(
        kernel,
        out_shape=jax.ShapeDtypeStruct((num_partials * SUBLANES, LANES), jnp.float32),
        grid_spec=pltpu.PrefetchScalarGridSpec(
            num_scalar_prefetch=0,
            grid=(num_partials, steps),
            in_specs=[in_spec, in_spec],
            out_specs=out_spec,
        ),
        compiler_params=pltpu.CompilerParams(
            # On v7x, pltpu.CORE_PARALLEL on the leading axis is worth trying;
            # plain "parallel" kept here as the known-safe choice.
            dimension_semantics=("parallel", "arbitrary"),
        ),
    )(x2, t2)

    # Tiny XLA reduce + mean normalization outside the kernel.
    return (jnp.sum(partials) / jnp.float32(n)).astype(jnp.float32)


def focal_loss_ref(predict, target, alpha=0.25, gamma=2.0):
    """Pure-JAX reference mirroring the PyTorch module."""
    p = jax.nn.sigmoid(predict).reshape(-1).astype(jnp.float32)
    t = target.reshape(-1).astype(jnp.float32)
    bce = -(t * jnp.maximum(jnp.log(p), -100.0)
            + (1.0 - t) * jnp.maximum(jnp.log(1.0 - p), -100.0))
    pt = t * p + (1.0 - t) * (1.0 - p)
    loss = (alpha * t + (1.0 - alpha) * (1.0 - t)) * (1.0 - pt) ** gamma * bce
    return jnp.mean(loss)


if __name__ == "__main__":
    key = jax.random.PRNGKey(0)
    k1, k2 = jax.random.split(key)
    # NCHW-shaped logits and binary targets (segmentation style)
    predict = jax.random.normal(k1, (2, 4, 16, 16), dtype=jnp.float32)
    target = (jax.random.uniform(k2, (2, 4, 16, 16)) > 0.8).astype(jnp.float32)

    out = focal_loss(predict, target)
    out = jax.block_until_ready(out)

    ref = focal_loss_ref(predict, target)
    assert jnp.allclose(out, ref, rtol=1e-4, atol=1e-6), (out, ref)
    print("KERNEL_OK")
</pallas_src>

<mosaic_0001>
module attributes {stable_mosaic.version = 11 : i64} {
  func.func @_focal_loss_kernel(%arg0: i32, %arg1: i32, %arg2: memref<16x128xf32, #tpu.memory_space<vmem>>, %arg3: memref<16x128xf32, #tpu.memory_space<vmem>>, %arg4: memref<8x128xf32, #tpu.memory_space<vmem>>) attributes {dimension_semantics = [#tpu.dimension_semantics<parallel>, #tpu.dimension_semantics<arbitrary>], iteration_bounds = array<i64: 1, 1>, scalar_prefetch = 0 : i64, scratch_operands = 0 : i64, tpu.core_type = #tpu.core_type<tc>, window_params = [{transform_indices = @transform_0, window_bounds = array<i64: 16, 128>}, {transform_indices = @transform_1, window_bounds = array<i64: 16, 128>}, {transform_indices = @transform_2, window_bounds = array<i64: 8, 128>}]} {
    %c0_i32 = arith.constant 0 : i32
    %0 = arith.cmpi eq, %arg1, %c0_i32 : i32
    %1 = arith.extui %0 : i1 to i32
    %c0_i32_0 = arith.constant 0 : i32
    %2 = arith.cmpi ne, %1, %c0_i32_0 : i32
    scf.if %2 {
      %cst_17 = arith.constant 0.000000e+00 : f32
      %46 = vector.broadcast %cst_17 : f32 to vector<8x128xf32>
      %c0_18 = arith.constant 0 : index
      %c0_19 = arith.constant 0 : index
      %47 = vector.load %arg4[%c0_18, %c0_19] : memref<8x128xf32, #tpu.memory_space<vmem>>, vector<8x128xf32>
      tpu.vector_store %arg4[%c0_18, %c0_19], %46 {strides = array<i32>} : memref<8x128xf32, #tpu.memory_space<vmem>>, vector<8x128xf32>,
    } else {
    }
    %c0 = arith.constant 0 : index
    %c0_1 = arith.constant 0 : index
    %3 = vector.load %arg2[%c0, %c0_1] : memref<16x128xf32, #tpu.memory_space<vmem>>, vector<16x128xf32>
    %c0_2 = arith.constant 0 : index
    %c0_3 = arith.constant 0 : index
    %4 = vector.load %arg3[%c0_2, %c0_3] : memref<16x128xf32, #tpu.memory_space<vmem>>, vector<16x128xf32>
    %5 = arith.negf %3 : vector<16x128xf32>
    %6 = math.exp %5 : vector<16x128xf32>
    %cst = arith.constant 1.000000e+00 : f32
    %7 = vector.broadcast %cst : f32 to vector<16x128xf32>
    %8 = arith.addf %7, %6 : vector<16x128xf32>
    %9 = arith.divf %7, %8 : vector<16x128xf32>
    %10 = math.log %9 : vector<16x128xf32>
    %cst_4 = arith.constant -1.000000e+02 : f32
    %11 = vector.broadcast %cst_4 : f32 to vector<16x128xf32>
    %12 = arith.maximumf %10, %11 : vector<16x128xf32>
    %cst_5 = arith.constant 1.000000e+00 : f32
    %13 = vector.broadcast %cst_5 : f32 to vector<16x128xf32>
    %14 = arith.subf %13, %9 : vector<16x128xf32>
    %15 = math.log %14 : vector<16x128xf32>
    %cst_6 = arith.constant -1.000000e+02 : f32
    %16 = vector.broadcast %cst_6 : f32 to vector<16x128xf32>
    %17 = arith.maximumf %15, %16 : vector<16x128xf32>
    %18 = arith.subf %12, %17 : vector<16x128xf32>
    %19 = arith.mulf %4, %18 : vector<16x128xf32>
    %20 = arith.addf %17, %19 : vector<16x128xf32>
    %cst_7 = arith.constant 0.000000e+00 : f32
    %21 = vector.broadcast %cst_7 : f32 to vector<16x128xf32>
    %22 = arith.subf %21, %20 : vector<16x128xf32>
    %cst_8 = arith.constant 2.000000e+00 : f32
    %23 = vector.broadcast %cst_8 : f32 to vector<16x128xf32>
    %24 = arith.mulf %23, %9 : vector<16x128xf32>
    %cst_9 = arith.constant 1.000000e+00 : f32
    %25 = vector.broadcast %cst_9 : f32 to vector<16x128xf32>
    %26 = arith.subf %25, %24 : vector<16x128xf32>
    %27 = arith.mulf %4, %26 : vector<16x128xf32>
    %28 = arith.addf %9, %27 : vector<16x128xf32>
    %29 = arith.mulf %28, %28 : vector<16x128xf32>
    %cst_10 = arith.constant -5.000000e-01 : f32
    %30 = vector.broadcast %cst_10 : f32 to vector<16x128xf32>
    %31 = arith.mulf %30, %4 : vector<16x128xf32>
    %cst_11 = arith.constant 7.500000e-01 : f32
    %32 = vector.broadcast %cst_11 : f32 to vector<16x128xf32>
    %33 = arith.addf %32, %31 : vector<16x128xf32>
    %34 = arith.mulf %33, %29 : vector<16x128xf32>
    %35 = arith.mulf %34, %22 : vector<16x128xf32>
    %c1_i32 = arith.constant 1 : i32
    %36 = arith.muli %arg0, %c1_i32 : i32
    %37 = arith.addi %36, %arg1 : i32
    %c16_i32 = arith.constant 16 : i32
    %38 = arith.muli %37, %c16_i32 : i32
    %c16_i32_12 = arith.constant 16 : i32
    %39 = arith.subi %c16_i32_12, %38 : i32
    %c16_i32_13 = arith.constant 16 : i32
    %40 = arith.cmpi sge, %39, %c16_i32_13 : i32
    %41 = arith.extui %40 : i1 to i32
    %c0_i32_14 = arith.constant 0 : i32
    %42 = arith.cmpi ne, %41, %c0_i32_14 : i32
    scf.if %42 {
      %c0_17 = arith.constant 0 : index
      %c0_18 = arith.constant 0 : index
      %46 = vector.load %arg4[%c0_17, %c0_18] : memref<8x128xf32, #tpu.memory_space<vmem>>, vector<8x128xf32>
      %47 = vector.shape_cast %35 : vector<16x128xf32> to vector<2x8x128xf32>
      %cst_19 = arith.constant dense<0.000000e+00> : vector<8x128xf32>
      %48 = vector.multi_reduction <add>, %47, %cst_19 [0] : vector<2x8x128xf32> to vector<8x128xf32>
      %49 = arith.addf %46, %48 : vector<8x128xf32>
      %c0_20 = arith.constant 0 : index
      %c0_21 = arith.constant 0 : index
      %50 = vector.load %arg4[%c0_20, %c0_21] : memref<8x128xf32, #tpu.memory_space<vmem>>, vector<8x128xf32>
      tpu.vector_store %arg4[%c0_20, %c0_21], %49 {strides = array<i32>} : memref<8x128xf32, #tpu.memory_space<vmem>>, vector<8x128xf32>,
    } else {
    }
    %c16_i32_15 = arith.constant 16 : i32
    %43 = arith.cmpi slt, %39, %c16_i32_15 : i32
    %44 = arith.extui %43 : i1 to i32
    %c0_i32_16 = arith.constant 0 : i32
    %45 = arith.cmpi ne, %44, %c0_i32_16 : i32
    scf.if %45 {
      %46 = tpu.iota {dimensions = array<i32: 0>} : vector<16x128xi32>
      %47 = vector.broadcast %39 : i32 to vector<16x128xi32>
      %48 = arith.cmpi slt, %46, %47 : vector<16x128xi32>
      %cst_17 = arith.constant 0.000000e+00 : f32
      %49 = vector.broadcast %cst_17 : f32 to vector<16x128xf32>
      %50 = arith.select %48, %35, %49 : vector<16x128xi1>, vector<16x128xf32>
      %c0_18 = arith.constant 0 : index
      %c0_19 = arith.constant 0 : index
      %51 = vector.load %arg4[%c0_18, %c0_19] : memref<8x128xf32, #tpu.memory_space<vmem>>, vector<8x128xf32>
      %52 = vector.shape_cast %50 : vector<16x128xf32> to vector<2x8x128xf32>
      %cst_20 = arith.constant dense<0.000000e+00> : vector<8x128xf32>
      %53 = vector.multi_reduction <add>, %52, %cst_20 [0] : vector<2x8x128xf32> to vector<8x128xf32>
      %54 = arith.addf %51, %53 : vector<8x128xf32>
      %c0_21 = arith.constant 0 : index
      %c0_22 = arith.constant 0 : index
      %55 = vector.load %arg4[%c0_21, %c0_22] : memref<8x128xf32, #tpu.memory_space<vmem>>, vector<8x128xf32>
      tpu.vector_store %arg4[%c0_21, %c0_22], %54 {strides = array<i32>} : memref<8x128xf32, #tpu.memory_space<vmem>>, vector<8x128xf32>,
    } else {
    }
    return
  }
  func.func @transform_0(%arg0: i32, %arg1: i32) -> (i32, i32) {
    %c1_i32 = arith.constant 1 : i32
    %0 = arith.muli %arg0, %c1_i32 : i32
    %1 = arith.addi %0, %arg1 : i32
    %c0_i32 = arith.constant 0 : i32
    %2 = arith.minsi %1, %c0_i32 : i32
    %c0_i32_0 = arith.constant 0 : i32
    %c0_i32_1 = arith.constant 0 : i32
    return %2, %c0_i32_0 : i32, i32
  }
  func.func @transform_1(%arg0: i32, %arg1: i32) -> (i32, i32) {
    %c1_i32 = arith.constant 1 : i32
    %0 = arith.muli %arg0, %c1_i32 : i32
    %1 = arith.addi %0, %arg1 : i32
    %c0_i32 = arith.constant 0 : i32
    %2 = arith.minsi %1, %c0_i32 : i32
    %c0_i32_0 = arith.constant 0 : i32
    %c0_i32_1 = arith.constant 0 : i32
    return %2, %c0_i32_0 : i32, i32
  }
  func.func @transform_2(%arg0: i32, %arg1: i32) -> (i32, i32) {
    %c0_i32 = arith.constant 0 : i32
    %c0_i32_0 = arith.constant 0 : i32
    return %arg0, %c0_i32 : i32, i32
  }
}

</mosaic_0001>

<llo_original>
// kernel: tpu_custom_call.1
$region0: #{tpu_custom_call.1}
  #allocation0 [shape = 'u32[]', space=smem, size = 0x4, offset = 0x4, fixed_abs, tag = 'smem constant byte address 0x4 - core index']
  #allocation1 [shape = 'u32[144,128]{1,0:T(1,128)}', space=vmem, size = 0x12000, scoped, tag = 'internal scratch']
  %s0 = inlined_call_operand.hbm [shape: f32[16,128], index: 0, kind: input, shape index: {}]
  %s1 = inlined_call_operand.hbm [shape: f32[16,128], index: 1, kind: input, shape index: {}]
  %s2 = inlined_call_operand.hbm [shape: f32[8,128], index: 2, kind: output, shape index: {}]
  %s3 = sld [smem:[#allocation0]]
  $region38: #{tpu_custom_call.1} parent=0
    _
  %s5 = ssub.s32 1, %s3
  %s6 = scalar_select 0, %s5, %s3
  $region1: #{tpu_custom_call.1} parent=0
    #allocation2 [shape = 'u8[8192]{0}', space=vmem, size = 0x2000, scoped, tag = 'input window, operand 0, single buffered']
    #allocation3 [shape = 's32[1]{0}', space=sflag, size = 0x4, scoped, tag = 'scoped memory for tpu_custom_call.1']
    #allocation4 [shape = 's32[1]{0}', space=sflag, size = 0x4, scoped, tag = 'scoped memory for tpu_custom_call.1']
    #allocation5 [shape = 'u8[8192]{0}', space=vmem, size = 0x2000, scoped, tag = 'input window, operand 1, single buffered']
    #allocation6 [shape = 's32[1]{0}', space=sflag, size = 0x4, scoped, tag = 'scoped memory for tpu_custom_call.1']
    #allocation7 [shape = 'u8[4096]{0}', space=vmem, size = 0x1000, scoped, tag = 'output window, operand 0, single buffered']
    %7 = vsyncpa [#allocation3], 0
    %8 = vsyncpa [#allocation6], 0
    %9 = vsyncpa [#allocation4], 0
    // Predicated region
    $region2: #{tpu_custom_call.1} parent=1 // pred_check
      _
    $region3: #{tpu_custom_call.1} parent=1 // pred_check_branch
      %11 = sbr.rel (0) target = $region5
    $region4: #{tpu_custom_call.1} parent=1 // pred_region
      %s12 = sadd.s32 0, 0
      %p13 = scmp.lt.s32.totalorder %s12, 0
      %s14 = scalar_select %p13, %s12, 0
      %s15 = smul.u32 2, %s14
      %s17 = ssub.s32 256, 256
      %18 = vsyncadd [#allocation3], %s17
      %s19 = smul.addr %s15, 128
      %s20 = scalar_lea.hbm %s0, %s19
      %s21 = sshll.u32 [#allocation2], 4
      %s22 = int_to_ptr.vmem [resolvable:$true] %s21
      %27 = dma.hbm_to_vmem [thread:$0]  %s20, 256, %s22, [#allocation3], 128, 128, 8
    $region5: #{tpu_custom_call.1} parent=1 // pred_fallthru
      _
    // Predicated region
    $region6: #{tpu_custom_call.1} parent=1 // pred_check
      _
    $region7: #{tpu_custom_call.1} parent=1 // pred_check_branch
      %29 = sbr.rel (0) target = $region9
    $region8: #{tpu_custom_call.1} parent=1 // pred_region
      %s30 = sadd.s32 0, 0
      %p31 = scmp.lt.s32.totalorder %s30, 0
      %s32 = scalar_select %p31, %s30, 0
      %s33 = smul.u32 2, %s32
      %s35 = ssub.s32 256, 256
      %36 = vsyncadd [#allocation6], %s35
      %s37 = smul.addr %s33, 128
      %s38 = scalar_lea.hbm %s1, %s37
      %s39 = sshll.u32 [#allocation5], 4
      %s40 = int_to_ptr.vmem [resolvable:$true] %s39
      %45 = dma.hbm_to_vmem [thread:$0]  %s38, 256, %s40, [#allocation6], 128, 128, 8
    $region9: #{tpu_custom_call.1} parent=1 // pred_fallthru
      _
    // Predicated region
    $region10: #{tpu_custom_call.1} parent=1 // pred_check
      _
    $region11: #{tpu_custom_call.1} parent=1 // pred_check_branch
      %47 = sbr.rel (0) target = $region13
    $region12: #{tpu_custom_call.1} parent=1 // pred_region
      %48 = dma.done [#allocation3], 256
    $region13: #{tpu_custom_call.1} parent=1 // pred_fallthru
      _
    // Predicated region
    $region14: #{tpu_custom_call.1} parent=1 // pred_check
      _
    $region15: #{tpu_custom_call.1} parent=1 // pred_check_branch
      %50 = sbr.rel (0) target = $region17
    $region16: #{tpu_custom_call.1} parent=1 // pred_region
      %51 = dma.done [#allocation6], 256
    $region17: #{tpu_custom_call.1} parent=1 // pred_fallthru
      _
    %s52 = sadd.s32 0, 0
    %p53 = scmp.lt.s32.totalorder %s52, 0
    %s54 = scalar_select %p53, %s52, 0
    %s55 = smul.u32 2, %s54
    %s56 = sadd.s32 0, 0
    %p57 = scmp.lt.s32.totalorder %s56, 0
    %s58 = scalar_select %p57, %s56, 0
    %s59 = smul.u32 2, %s58
    %p60 = scmp.eq.s32.totalorder 0, 0
    // Predicated region
    $region18: #{tpu_custom_call.1} parent=1 // pred_check
      %p61 = pneg %p60
    $region19: #{tpu_custom_call.1} parent=1 // pred_check_branch
      %63 = sbr.rel (%p61) target = $region21
    $region20: #{tpu_custom_call.1} parent=1 // pred_region
      %64 = vst [vmem:[#allocation7] sm:$0xff] 0.0
    $region21: #{tpu_custom_call.1} parent=1 // pred_fallthru
      _
    %v65 = vld [vmem:[#allocation2] sm:$0xff]
    %v66 = vld [vmem:[#allocation2 + $0x8] sm:$0xff]
    %v67 = vld [vmem:[#allocation5] sm:$0xff]
    %v68 = vld [vmem:[#allocation5 + $0x8] sm:$0xff]
    %v69 = vxor.u32 %v65, 2147483648
    %v70 = vxor.u32 %v66, 2147483648
    %v71 = vmul.f32 %v69, 1.442695
    %v72 = vpow.pop %v71
    %v73 = vmul.f32 %v70, 1.442695
    %v74 = vpow.pop %v73
    %v75 = vadd.f32 %v72, 1.0
    %v76 = vadd.f32 %v74, 1.0
    %v77 = vrcp.pop %v75
    %v78 = vmul.f32 1.0, %v77
    %v79 = vrcp.pop %v76
    %v80 = vmul.f32 1.0, %v79
    %v81 = vlog2.pop %v78
    %v82 = vmul.f32 %v81, 0.6931472
    %v83 = vlog2.pop %v80
    %v84 = vmul.f32 %v83, 0.6931472
    %v85 = vmax.f32 %v82, -100.0
    %v86 = vmax.f32 %v84, -100.0
    %v87 = vsub.f32 1.0, %v78
    %v88 = vsub.f32 1.0, %v80
    %v89 = vlog2.pop %v87
    %v90 = vmul.f32 %v89, 0.6931472
    %v91 = vlog2.pop %v88
    %v92 = vmul.f32 %v91, 0.6931472
    %v93 = vmax.f32 %v90, -100.0
    %v94 = vmax.f32 %v92, -100.0
    %v95 = vsub.f32 %v85, %v93
    %v96 = vsub.f32 %v86, %v94
    %v97 = vmul.f32 %v67, %v95
    %v98 = vmul.f32 %v68, %v96
    %v99 = vadd.f32 %v93, %v97
    %v100 = vadd.f32 %v94, %v98
    %v101 = vsub.f32 0.0, %v99
    %v102 = vsub.f32 0.0, %v100
    %v103 = vmul.f32 %v78, 2.0
    %v104 = vmul.f32 %v80, 2.0
    %v105 = vsub.f32 1.0, %v103
    %v106 = vsub.f32 1.0, %v104
    %v107 = vmul.f32 %v67, %v105
    %v108 = vmul.f32 %v68, %v106
    %v109 = vadd.f32 %v78, %v107
    %v110 = vadd.f32 %v80, %v108
    %v111 = vmul.f32 %v109, %v109
    %v112 = vmul.f32 %v110, %v110
    %v113 = vmul.f32 %v67, -0.5
    %v114 = vmul.f32 %v68, -0.5
    %v115 = vadd.f32 %v113, 0.75
    %v116 = vadd.f32 %v114, 0.75
    %v117 = vmul.f32 %v115, %v111
    %v118 = vmul.f32 %v116, %v112
    %v119 = vmul.f32 %v117, %v101
    %v120 = vmul.f32 %v118, %v102
    %s121 = sadd.s32 0, 0
    %s122 = smul.u32 %s121, 16
    %s123 = ssub.s32 16, %s122
    %p124 = scmp.ge.s32.totalorder %s123, 16
    // Predicated region
    $region22: #{tpu_custom_call.1} parent=1 // pred_check
      %p125 = pneg %p124
    $region23: #{tpu_custom_call.1} parent=1 // pred_check_branch
      %127 = sbr.rel (%p125) target = $region25
    $region24: #{tpu_custom_call.1} parent=1 // pred_region
      %v128 = vld [vmem:[#allocation7] sm:$0xff]
      %v129 = vadd.f32 %v119, %v120
      %v130 = vadd.f32 %v128, %v129
      %131 = vst [vmem:[#allocation7] sm:$0xff] %v130
    $region25: #{tpu_custom_call.1} parent=1 // pred_fallthru
      _
    %p132 = scmp.lt.s32.totalorder %s123, 16
    // Predicated region
    $region26: #{tpu_custom_call.1} parent=1 // pred_check
      %p133 = pneg %p132
    $region27: #{tpu_custom_call.1} parent=1 // pred_check_branch
      %135 = sbr.rel (%p133) target = $region29
    $region28: #{tpu_custom_call.1} parent=1 // pred_region
      %v136 = vlaneseq
      %v137 = vshrl.u32 %v136, 7
      %v138 = vadd.s32 %v137, 8
      %v139 = vstv %s123
      %vm140 = vcmp.lt.s32.totalorder %v137, %v139
      %vm141 = vcmp.lt.s32.totalorder %v138, %v139
      %v142 = vsel %vm140, %v119, 0.0
      %v143 = vsel %vm141, %v120, 0.0
      %v144 = vld [vmem:[#allocation7] sm:$0xff]
      %v145 = vadd.f32 %v142, %v143
      %v146 = vadd.f32 %v144, %v145
      %147 = vst [vmem:[#allocation7] sm:$0xff] %v146
    $region29: #{tpu_custom_call.1} parent=1 // pred_fallthru
      _
    // Predicated region
    $region30: #{tpu_custom_call.1} parent=1 // pred_check
      _
    $region31: #{tpu_custom_call.1} parent=1 // pred_check_branch
      %149 = sbr.rel (0) target = $region33
    $region32: #{tpu_custom_call.1} parent=1 // pred_region
      %s151 = ssub.s32 128, 128
      %152 = vsyncadd [#allocation4], %s151
      %s154 = sshll.u32 [#allocation7], 4
      %s155 = int_to_ptr.vmem [resolvable:$true] %s154
      %157 = dma.vmem_to_hbm [thread:$0]  %s155, 128, %s2, [#allocation4]
    $region33: #{tpu_custom_call.1} parent=1 // pred_fallthru
      _
    // Predicated region
    $region34: #{tpu_custom_call.1} parent=1 // pred_check
      _
    $region35: #{tpu_custom_call.1} parent=1 // pred_check_branch
      %159 = sbr.rel (0) target = $region37
    $region36: #{tpu_custom_call.1} parent=1 // pred_region
      %160 = dma.done [#allocation4], 128
    $region37: #{tpu_custom_call.1} parent=1 // pred_fallthru
      _
    %161 = vsyncpa [#allocation3], 1
    %162 = vsyncpa [#allocation6], 1
    %163 = vsyncpa [#allocation4], 1

</llo_original>
